<compile_context>
chip_gen: v5e
topology: v5e:2x2
jax: 0.10.0
libtpu: 0.0.40
codegen_flags: <defaults>
</compile_context>

<pallas_src>
import functools

import jax
import jax.numpy as jnp
from jax.experimental import pallas as pl
from jax.experimental.pallas import tpu as pltpu


def _round_up(x, m):
    return (x + m - 1) // m * m


def qnet_kernel(x_ref, w1_ref, w2_ref, w3_ref, bias_ref, o_ref, *, hidden, out_lanes):
    # Biases are packed into rows 0..2 of a single (8, LN) f32 buffer.
    b1 = bias_ref[0:1, :hidden]
    b2 = bias_ref[1:2, :hidden]
    b3 = bias_ref[2:3, :out_lanes]

    x = x_ref[...]  # (TB, OBS_P) bf16, zero-padded feature lanes
    h1 = jnp.dot(x, w1_ref[...], preferred_element_type=jnp.float32) + b1
    h1 = jnp.maximum(h1, 0.0).astype(jnp.bfloat16)
    h2 = jnp.dot(h1, w2_ref[...], preferred_element_type=jnp.float32) + b2
    h2 = jnp.maximum(h2, 0.0).astype(jnp.bfloat16)
    q = jnp.dot(h2, w3_ref[...], preferred_element_type=jnp.float32) + b3
    o_ref[...] = q.astype(o_ref.dtype)  # lane-dense (TB, 128) store


def qnetwork_forward(state, params, batch_tile=256):
    """state: (B, observation_space) float32; params: (w1, b1, w2, b2, w3, b3) float32.

    Returns (B, action_space) float32 Q-values, matching PyTorch nn.Linear semantics
    (weights stored as (in_features, out_features) so y = x @ W + b).
    """
    w1, b1, w2, b2, w3, b3 = params
    B, obs = state.shape
    H = w1.shape[1]
    A = w3.shape[1]

    OBS_P = _round_up(obs, 128)          # pad obs features to a full lane group
    A_P = _round_up(A, 128)              # lane-pad output (unmasked stores)
    LN = max(_round_up(H, 128), A_P)     # lane width of the packed bias buffer

    # Batch tiling: small batches become one tile; large batches are tiled at
    # batch_tile rows with weights resident in VMEM across tiles.
    if B <= batch_tile:
        TB = _round_up(max(B, 1), 8)
    else:
        TB = batch_tile
    B_pad = _round_up(B, TB)
    grid = (B_pad // TB,)

    # bf16 weights / activations, zero-padded to lane-friendly shapes (exact under
    # f32 accumulation since padded entries are 0).
    x_p = jnp.zeros((B_pad, OBS_P), jnp.bfloat16).at[:B, :obs].set(state.astype(jnp.bfloat16))
    w1_p = jnp.zeros((OBS_P, H), jnp.bfloat16).at[:obs, :].set(w1.astype(jnp.bfloat16))
    w2_p = w2.astype(jnp.bfloat16)
    w3_p = jnp.zeros((H, A_P), jnp.bfloat16).at[:, :A].set(w3.astype(jnp.bfloat16))

    bias = jnp.zeros((8, LN), jnp.float32)
    bias = bias.at[0, :H].set(b1.reshape(-1).astype(jnp.float32))
    bias = bias.at[1, :H].set(b2.reshape(-1).astype(jnp.float32))
    bias = bias.at[2, :A].set(b3.reshape(-1).astype(jnp.float32))

    flops = 2 * B_pad * (OBS_P * H + H * H + H * A_P)
    bytes_accessed = (
        x_p.size * 2 + w1_p.size * 2 + w2_p.size * 2 + w3_p.size * 2
        + bias.size * 4 + B_pad * A_P * 4
    )

    kernel = functools.partial(qnet_kernel, hidden=H, out_lanes=A_P)
    out = pl.pallas_call(
        kernel,
        out_shape=jax.ShapeDtypeStruct((B_pad, A_P), jnp.float32),
        grid=grid,
        in_specs=[
            pl.BlockSpec((TB, OBS_P), lambda i: (i, 0)),   # per-tile batch of states
            pl.BlockSpec((OBS_P, H), lambda i: (0, 0)),    # weights: loaded once, reused
            pl.BlockSpec((H, H), lambda i: (0, 0)),
            pl.BlockSpec((H, A_P), lambda i: (0, 0)),
            pl.BlockSpec((8, LN), lambda i: (0, 0)),       # packed biases (single tile)
        ],
        out_specs=pl.BlockSpec((TB, A_P), lambda i: (i, 0)),
        compiler_params=pltpu.CompilerParams(dimension_semantics=("parallel",)),
        cost_estimate=pl.CostEstimate(
            flops=flops, transcendentals=0, bytes_accessed=bytes_accessed
        ),
    )(x_p, w1_p, w2_p, w3_p, bias)

    return out[:B, :A]


def init_params(key, observation_space, action_space, internal_nodes=128):
    """Deterministic init mirroring PyTorch nn.Linear default U(-1/sqrt(fan_in), +1/sqrt(fan_in))."""
    def linear_init(k, fan_in, fan_out):
        kw, kb = jax.random.split(k)
        bound = 1.0 / jnp.sqrt(jnp.float32(fan_in))
        w = jax.random.uniform(kw, (fan_in, fan_out), jnp.float32, -bound, bound)
        b = jax.random.uniform(kb, (1, fan_out), jnp.float32, -bound, bound)
        return w, b

    k1, k2, k3 = jax.random.split(key, 3)
    w1, b1 = linear_init(k1, observation_space, internal_nodes)
    w2, b2 = linear_init(k2, internal_nodes, internal_nodes)
    w3, b3 = linear_init(k3, internal_nodes, action_space)
    return (w1, b1, w2, b2, w3, b3)


def reference_forward_f32(state, params):
    w1, b1, w2, b2, w3, b3 = params
    h1 = jnp.maximum(state @ w1 + b1, 0.0)
    h2 = jnp.maximum(h1 @ w2 + b2, 0.0)
    return h2 @ w3 + b3


def reference_forward_bf16(state, params):
    """Reference that mirrors the kernel's bf16-weights / f32-accumulate arithmetic."""
    w1, b1, w2, b2, w3, b3 = params
    xb = state.astype(jnp.bfloat16)
    h1 = jnp.dot(xb, w1.astype(jnp.bfloat16), preferred_element_type=jnp.float32) + b1
    h1 = jnp.maximum(h1, 0.0).astype(jnp.bfloat16)
    h2 = jnp.dot(h1, w2.astype(jnp.bfloat16), preferred_element_type=jnp.float32) + b2
    h2 = jnp.maximum(h2, 0.0).astype(jnp.bfloat16)
    return jnp.dot(h2, w3.astype(jnp.bfloat16), preferred_element_type=jnp.float32) + b3


if __name__ == "__main__":
    observation_space = 4   # CartPole-like state
    action_space = 2
    internal_nodes = 128
    batch = 2

    key = jax.random.PRNGKey(0)
    k_params, k_state = jax.random.split(key)
    params = init_params(k_params, observation_space, action_space, internal_nodes)
    state = jax.random.normal(k_state, (batch, observation_space), jnp.float32)

    q_vals = jax.block_until_ready(qnetwork_forward(state, params))

    ref_bf16 = reference_forward_bf16(state, params)
    ref_f32 = reference_forward_f32(state, params)

    assert q_vals.shape == (batch, action_space)
    assert jnp.allclose(q_vals, ref_bf16, atol=2e-3, rtol=2e-3), \
        "Pallas output mismatch vs bf16-matched reference"
    assert jnp.allclose(q_vals, ref_f32, atol=5e-2, rtol=5e-2), \
        "Pallas output mismatch vs f32 reference"

    print("KERNEL_OK")
</pallas_src>

<mosaic_0001>
module attributes {stable_mosaic.version = 11 : i64} {
  func.func @qnet_kernel(%arg0: i32, %arg1: memref<8x128xbf16, #tpu.memory_space<vmem>>, %arg2: memref<128x128xbf16, #tpu.memory_space<vmem>>, %arg3: memref<128x128xbf16, #tpu.memory_space<vmem>>, %arg4: memref<128x128xbf16, #tpu.memory_space<vmem>>, %arg5: memref<8x128xf32, #tpu.memory_space<vmem>>, %arg6: memref<8x128xf32, #tpu.memory_space<vmem>>) attributes {dimension_semantics = [#tpu.dimension_semantics<parallel>], iteration_bounds = array<i64: 1>, scalar_prefetch = 0 : i64, scratch_operands = 0 : i64, tpu.core_type = #tpu.core_type<tc>, window_params = [{transform_indices = @transform_0, window_bounds = array<i64: 8, 128>}, {pipeline_mode = #tpu.pipeline_mode<synchronous>, transform_indices = @transform_1, window_bounds = array<i64: 128, 128>}, {pipeline_mode = #tpu.pipeline_mode<synchronous>, transform_indices = @transform_2, window_bounds = array<i64: 128, 128>}, {pipeline_mode = #tpu.pipeline_mode<synchronous>, transform_indices = @transform_3, window_bounds = array<i64: 128, 128>}, {pipeline_mode = #tpu.pipeline_mode<synchronous>, transform_indices = @transform_4, window_bounds = array<i64: 8, 128>}, {transform_indices = @transform_5, window_bounds = array<i64: 8, 128>}]} {
    %c0 = arith.constant 0 : index
    %c0_0 = arith.constant 0 : index
    %0 = vector.load %arg5[%c0, %c0_0] : memref<8x128xf32, #tpu.memory_space<vmem>>, vector<1x128xf32>
    %c1 = arith.constant 1 : index
    %c0_1 = arith.constant 0 : index
    %1 = vector.load %arg5[%c1, %c0_1] : memref<8x128xf32, #tpu.memory_space<vmem>>, vector<1x128xf32>
    %c2 = arith.constant 2 : index
    %c0_2 = arith.constant 0 : index
    %2 = vector.load %arg5[%c2, %c0_2] : memref<8x128xf32, #tpu.memory_space<vmem>>, vector<1x128xf32>
    %c0_3 = arith.constant 0 : index
    %c0_4 = arith.constant 0 : index
    %3 = vector.load %arg1[%c0_3, %c0_4] : memref<8x128xbf16, #tpu.memory_space<vmem>>, vector<8x128xbf16>
    %c0_5 = arith.constant 0 : index
    %c0_6 = arith.constant 0 : index
    %4 = vector.load %arg2[%c0_5, %c0_6] : memref<128x128xbf16, #tpu.memory_space<vmem>>, vector<128x128xbf16>
    %cst = arith.constant dense<0.000000e+00> : vector<8x128xf32>
    %5 = tpu.matmul %3, %4, %cst {dimension_numbers = #tpu.dot_dimension_numbers<[1], [0], [0], [1], [0, 0, 1, 1], [], []>} : vector<8x128xbf16>, vector<128x128xbf16>, vector<8x128xf32> -> vector<8x128xf32>
    %6 = vector.broadcast %0 : vector<1x128xf32> to vector<8x128xf32>
    %7 = arith.addf %5, %6 : vector<8x128xf32>
    %cst_7 = arith.constant 0.000000e+00 : f32
    %8 = vector.broadcast %cst_7 : f32 to vector<8x128xf32>
    %9 = arith.maximumf %7, %8 : vector<8x128xf32>
    %10 = arith.truncf %9 : vector<8x128xf32> to vector<8x128xbf16>
    %c0_8 = arith.constant 0 : index
    %c0_9 = arith.constant 0 : index
    %11 = vector.load %arg3[%c0_8, %c0_9] : memref<128x128xbf16, #tpu.memory_space<vmem>>, vector<128x128xbf16>
    %cst_10 = arith.constant dense<0.000000e+00> : vector<8x128xf32>
    %12 = tpu.matmul %10, %11, %cst_10 {dimension_numbers = #tpu.dot_dimension_numbers<[1], [0], [0], [1], [0, 0, 1, 1], [], []>} : vector<8x128xbf16>, vector<128x128xbf16>, vector<8x128xf32> -> vector<8x128xf32>
    %13 = vector.broadcast %1 : vector<1x128xf32> to vector<8x128xf32>
    %14 = arith.addf %12, %13 : vector<8x128xf32>
    %cst_11 = arith.constant 0.000000e+00 : f32
    %15 = vector.broadcast %cst_11 : f32 to vector<8x128xf32>
    %16 = arith.maximumf %14, %15 : vector<8x128xf32>
    %17 = arith.truncf %16 : vector<8x128xf32> to vector<8x128xbf16>
    %c0_12 = arith.constant 0 : index
    %c0_13 = arith.constant 0 : index
    %18 = vector.load %arg4[%c0_12, %c0_13] : memref<128x128xbf16, #tpu.memory_space<vmem>>, vector<128x128xbf16>
    %cst_14 = arith.constant dense<0.000000e+00> : vector<8x128xf32>
    %19 = tpu.matmul %17, %18, %cst_14 {dimension_numbers = #tpu.dot_dimension_numbers<[1], [0], [0], [1], [0, 0, 1, 1], [], []>} : vector<8x128xbf16>, vector<128x128xbf16>, vector<8x128xf32> -> vector<8x128xf32>
    %20 = vector.broadcast %2 : vector<1x128xf32> to vector<8x128xf32>
    %21 = arith.addf %19, %20 : vector<8x128xf32>
    %c0_15 = arith.constant 0 : index
    %c0_16 = arith.constant 0 : index
    %22 = vector.load %arg6[%c0_15, %c0_16] : memref<8x128xf32, #tpu.memory_space<vmem>>, vector<8x128xf32>
    tpu.vector_store %arg6[%c0_15, %c0_16], %21 {strides = array<i32>} : memref<8x128xf32, #tpu.memory_space<vmem>>, vector<8x128xf32>,
    return
  }
  func.func @transform_0(%arg0: i32) -> (i32, i32) {
    %c0_i32 = arith.constant 0 : i32
    %c0_i32_0 = arith.constant 0 : i32
    return %arg0, %c0_i32 : i32, i32
  }
  func.func @transform_1(%arg0: i32) -> (i32, i32) {
    %c0_i32 = arith.constant 0 : i32
    %c0_i32_0 = arith.constant 0 : i32
    %c0_i32_1 = arith.constant 0 : i32
    return %c0_i32, %c0_i32_0 : i32, i32
  }
  func.func @transform_2(%arg0: i32) -> (i32, i32) {
    %c0_i32 = arith.constant 0 : i32
    %c0_i32_0 = arith.constant 0 : i32
    %c0_i32_1 = arith.constant 0 : i32
    return %c0_i32, %c0_i32_0 : i32, i32
  }
  func.func @transform_3(%arg0: i32) -> (i32, i32) {
    %c0_i32 = arith.constant 0 : i32
    %c0_i32_0 = arith.constant 0 : i32
    %c0_i32_1 = arith.constant 0 : i32
    return %c0_i32, %c0_i32_0 : i32, i32
  }
  func.func @transform_4(%arg0: i32) -> (i32, i32) {
    %c0_i32 = arith.constant 0 : i32
    %c0_i32_0 = arith.constant 0 : i32
    %c0_i32_1 = arith.constant 0 : i32
    return %c0_i32, %c0_i32_0 : i32, i32
  }
  func.func @transform_5(%arg0: i32) -> (i32, i32) {
    %c0_i32 = arith.constant 0 : i32
    %c0_i32_0 = arith.constant 0 : i32
    return %arg0, %c0_i32 : i32, i32
  }
}

</mosaic_0001>

<llo_original>
// kernel: tpu_custom_call.1
$region0: #{tpu_custom_call.1}
  #allocation0 [shape = 'u32[]', space=smem, size = 0x4, offset = 0x4, fixed_abs, tag = 'smem constant byte address 0x4 - core index']
  #allocation1 [shape = 'u32[72,128]{1,0:T(1,128)}', space=vmem, size = 0x9000, scoped, tag = 'internal scratch']
  %s0 = inlined_call_operand.hbm [shape: bf16[8,128], index: 0, kind: input, shape index: {}]
  %s1 = inlined_call_operand.hbm [shape: bf16[128,128], index: 1, kind: input, shape index: {}]
  %s2 = inlined_call_operand.hbm [shape: bf16[128,128], index: 2, kind: input, shape index: {}]
  %s3 = inlined_call_operand.hbm [shape: bf16[128,128], index: 3, kind: input, shape index: {}]
  %s4 = inlined_call_operand.hbm [shape: f32[8,128], index: 4, kind: input, shape index: {}]
  %s5 = inlined_call_operand.hbm [shape: f32[8,128], index: 5, kind: output, shape index: {}]
  %s6 = sld [smem:[#allocation0]]
  $region50: #{tpu_custom_call.1} parent=0
    _
  %s8 = ssub.s32 1, %s6
  %s9 = scalar_select 0, %s8, %s6
  $region1: #{tpu_custom_call.1} parent=0
    #allocation2 [shape = 'u8[2048]{0}', space=vmem, size = 0x800, scoped, tag = 'input window, operand 0, single buffered']
    #allocation3 [shape = 's32[1]{0}', space=sflag, size = 0x4, scoped, tag = 'scoped memory for tpu_custom_call.1']
    #allocation4 [shape = 's32[1]{0}', space=sflag, size = 0x4, scoped, tag = 'scoped memory for tpu_custom_call.1']
    #allocation5 [shape = 'u8[32768]{0}', space=vmem, size = 0x8000, scoped, tag = 'input window, operand 1, single buffered']
    #allocation6 [shape = 's32[1]{0}', space=sflag, size = 0x4, scoped, tag = 'scoped memory for tpu_custom_call.1']
    #allocation7 [shape = 'u8[32768]{0}', space=vmem, size = 0x8000, scoped, tag = 'input window, operand 2, single buffered']
    #allocation8 [shape = 'u8[32768]{0}', space=vmem, size = 0x8000, scoped, tag = 'input window, operand 3, single buffered']
    #allocation9 [shape = 's32[1]{0}', space=sflag, size = 0x4, scoped, tag = 'scoped memory for tpu_custom_call.1']
    #allocation10 [shape = 'u8[4096]{0}', space=vmem, size = 0x1000, scoped, tag = 'input window, operand 4, single buffered']
    #allocation11 [shape = 'u8[4096]{0}', space=vmem, size = 0x1000, scoped, tag = 'output window, operand 0, single buffered']
    %10 = vsyncpa [#allocation3], 0
    %11 = vsyncpa [#allocation6], 0
    %12 = vsyncpa [#allocation9], 0
    %13 = vsyncpa [#allocation4], 0
    // Predicated region
    $region2: #{tpu_custom_call.1} parent=1 // pred_check
      _
    $region3: #{tpu_custom_call.1} parent=1 // pred_check_branch
      %15 = sbr.rel (0) target = $region5
    $region4: #{tpu_custom_call.1} parent=1 // pred_region
      %17 = vsyncadd [#allocation3], 0
      %s19 = sshll.u32 %s0, 4
      %s20 = int_to_ptr.hbm [resolvable:$true] %s19
      %s21 = sshll.u32 [#allocation2], 4
      %s22 = int_to_ptr.vmem [resolvable:$true] %s21
      %24 = dma.hbm_to_vmem [thread:$0]  %s20, 64, %s22, [#allocation3]
    $region5: #{tpu_custom_call.1} parent=1 // pred_fallthru
      _
    // Predicated region
    $region6: #{tpu_custom_call.1} parent=1 // pred_check
      _
    $region7: #{tpu_custom_call.1} parent=1 // pred_check_branch
      %26 = sbr.rel (0) target = $region9
    $region8: #{tpu_custom_call.1} parent=1 // pred_region
      %28 = vsyncadd [#allocation6], 0
      %s29 = sshll.u32 %s1, 4
      %s30 = int_to_ptr.hbm [resolvable:$true] %s29
      %s31 = sshll.u32 [#allocation5], 4
      %s32 = int_to_ptr.vmem [resolvable:$true] %s31
      %37 = dma.hbm_to_vmem [thread:$0]  %s30, 1024, %s32, [#allocation6], 64, 64, 4
    $region9: #{tpu_custom_call.1} parent=1 // pred_fallthru
      _
    // Predicated region
    $region10: #{tpu_custom_call.1} parent=1 // pred_check
      _
    $region11: #{tpu_custom_call.1} parent=1 // pred_check_branch
      %39 = sbr.rel (0) target = $region13
    $region12: #{tpu_custom_call.1} parent=1 // pred_region
      %41 = vsyncadd [#allocation6], 0
      %s42 = sshll.u32 %s2, 4
      %s43 = int_to_ptr.hbm [resolvable:$true] %s42
      %s44 = sshll.u32 [#allocation7], 4
      %s45 = int_to_ptr.vmem [resolvable:$true] %s44
      %50 = dma.hbm_to_vmem [thread:$0]  %s43, 1024, %s45, [#allocation6], 64, 64, 4
    $region13: #{tpu_custom_call.1} parent=1 // pred_fallthru
      _
    // Predicated region
    $region14: #{tpu_custom_call.1} parent=1 // pred_check
      _
    $region15: #{tpu_custom_call.1} parent=1 // pred_check_branch
      %52 = sbr.rel (0) target = $region17
    $region16: #{tpu_custom_call.1} parent=1 // pred_region
      %54 = vsyncadd [#allocation9], 0
      %s55 = sshll.u32 %s3, 4
      %s56 = int_to_ptr.hbm [resolvable:$true] %s55
      %s57 = sshll.u32 [#allocation8], 4
      %s58 = int_to_ptr.vmem [resolvable:$true] %s57
      %63 = dma.hbm_to_vmem [thread:$0]  %s56, 1024, %s58, [#allocation9], 64, 64, 4
    $region17: #{tpu_custom_call.1} parent=1 // pred_fallthru
      _
    // Predicated region
    $region18: #{tpu_custom_call.1} parent=1 // pred_check
      _
    $region19: #{tpu_custom_call.1} parent=1 // pred_check_branch
      %65 = sbr.rel (0) target = $region21
    $region20: #{tpu_custom_call.1} parent=1 // pred_region
      %67 = vsyncadd [#allocation9], 0
      %s69 = sshll.u32 %s4, 4
      %s70 = int_to_ptr.hbm [resolvable:$true] %s69
      %s71 = sshll.u32 [#allocation10], 4
      %s72 = int_to_ptr.vmem [resolvable:$true] %s71
      %74 = dma.hbm_to_vmem [thread:$0]  %s70, 128, %s72, [#allocation9]
    $region21: #{tpu_custom_call.1} parent=1 // pred_fallthru
      _
    // Predicated region
    $region22: #{tpu_custom_call.1} parent=1 // pred_check
      _
    $region23: #{tpu_custom_call.1} parent=1 // pred_check_branch
      %76 = sbr.rel (0) target = $region25
    $region24: #{tpu_custom_call.1} parent=1 // pred_region
      %78 = dma.done [#allocation3], 64
    $region25: #{tpu_custom_call.1} parent=1 // pred_fallthru
      _
    // Predicated region
    $region26: #{tpu_custom_call.1} parent=1 // pred_check
      _
    $region27: #{tpu_custom_call.1} parent=1 // pred_check_branch
      %80 = sbr.rel (0) target = $region29
    $region28: #{tpu_custom_call.1} parent=1 // pred_region
      %82 = dma.done [#allocation6], 1024
    $region29: #{tpu_custom_call.1} parent=1 // pred_fallthru
      _
    // Predicated region
    $region30: #{tpu_custom_call.1} parent=1 // pred_check
      _
    $region31: #{tpu_custom_call.1} parent=1 // pred_check_branch
      %84 = sbr.rel (0) target = $region33
    $region32: #{tpu_custom_call.1} parent=1 // pred_region
      %86 = dma.done [#allocation6], 1024
    $region33: #{tpu_custom_call.1} parent=1 // pred_fallthru
      _
    // Predicated region
    $region34: #{tpu_custom_call.1} parent=1 // pred_check
      _
    $region35: #{tpu_custom_call.1} parent=1 // pred_check_branch
      %88 = sbr.rel (0) target = $region37
    $region36: #{tpu_custom_call.1} parent=1 // pred_region
      %90 = dma.done [#allocation9], 1024
    $region37: #{tpu_custom_call.1} parent=1 // pred_fallthru
      _
    // Predicated region
    $region38: #{tpu_custom_call.1} parent=1 // pred_check
      _
    $region39: #{tpu_custom_call.1} parent=1 // pred_check_branch
      %92 = sbr.rel (0) target = $region41
    $region40: #{tpu_custom_call.1} parent=1 // pred_region
      %94 = dma.done [#allocation9], 128
    $region41: #{tpu_custom_call.1} parent=1 // pred_fallthru
      _
    %v95 = vld [vmem:[#allocation10] sm:$0x1]
    %v96 = vld [vmem:[#allocation10 + $0x1] sm:$0x1]
    %v97 = vld [vmem:[#allocation10 + $0x2] sm:$0x1]
    %v98 = vld [vmem:[#allocation2] sm:$0xf]
    %v99 = vld [vmem:[#allocation5] sm:$0xf]
    %v100 = vld [vmem:[#allocation5 + $0x4] sm:$0xf]
    %v101 = vld [vmem:[#allocation5 + $0x8] sm:$0xf]
    %v102 = vld [vmem:[#allocation5 + $0xc] sm:$0xf]
    %v103 = vld [vmem:[#allocation5 + $0x10] sm:$0xf]
    %v104 = vld [vmem:[#allocation5 + $0x14] sm:$0xf]
    %v105 = vld [vmem:[#allocation5 + $0x18] sm:$0xf]
    %v106 = vld [vmem:[#allocation5 + $0x1c] sm:$0xf]
    %v107 = vld [vmem:[#allocation5 + $0x20] sm:$0xf]
    %v108 = vld [vmem:[#allocation5 + $0x24] sm:$0xf]
    %v109 = vld [vmem:[#allocation5 + $0x28] sm:$0xf]
    %v110 = vld [vmem:[#allocation5 + $0x2c] sm:$0xf]
    %v111 = vld [vmem:[#allocation5 + $0x30] sm:$0xf]
    %v112 = vld [vmem:[#allocation5 + $0x34] sm:$0xf]
    %v113 = vld [vmem:[#allocation5 + $0x38] sm:$0xf]
    %v114 = vld [vmem:[#allocation5 + $0x3c] sm:$0xf]
    %v115 = vperm.slane %v95, 0
    %v132 = vunpack.c.l.b16 %v99
    %v133 = vunpack.c.l.b16 %v100
    %v134 = vunpack.c.l.b16 %v101
    %v135 = vunpack.c.l.b16 %v102
    %v136 = vunpack.c.l.b16 %v103
    %v137 = vunpack.c.l.b16 %v104
    %v138 = vunpack.c.l.b16 %v105
    %v139 = vunpack.c.l.b16 %v106
    %v140 = vunpack.c.l.b16 %v107
    %v141 = vunpack.c.l.b16 %v108
    %v142 = vunpack.c.l.b16 %v109
    %v143 = vunpack.c.l.b16 %v110
    %v144 = vunpack.c.l.b16 %v111
    %v145 = vunpack.c.l.b16 %v112
    %v146 = vunpack.c.l.b16 %v113
    %v147 = vunpack.c.l.b16 %v114
    %v148 = vpack.c.b16 %v133, %v132
    %v149 = vpack.c.b16 %v135, %v134
    %v150 = vpack.c.b16 %v137, %v136
    %v151 = vpack.c.b16 %v139, %v138
    %v152 = vpack.c.b16 %v141, %v140
    %v153 = vpack.c.b16 %v143, %v142
    %v154 = vpack.c.b16 %v145, %v144
    %v155 = vpack.c.b16 %v147, %v146
    %164 = vmatpush.bf16.msra.mxu0 %v155
    %165 = vmatpush.bf16.msra.mxu0 %v154
    %166 = vmatpush.bf16.msra.mxu0 %v153
    %167 = vmatpush.bf16.msra.mxu0 %v152
    %168 = vmatpush.bf16.msra.mxu0 %v151
    %169 = vmatpush.bf16.msra.mxu0 %v150
    %170 = vmatpush.bf16.msra.mxu0 %v149
    %171 = vmatpush.bf16.msra.mxu0 %v148
    %172 = vmatmul.bf16.gmra.mxu0 %v98
    %v173 = vpop.f32.mrf.mxu0
    %v174 = vadd.f32 %v115, %v173
    %v175 = vpop.f32.mrf.mxu0
    %176 = vdwg.mxu0
    %v177 = vmax.f32 %v174, 0.0
    %v178 = vpack.c.bf16 %v177, %v177
    %v179 = vld [vmem:[#allocation7] sm:$0xf]
    %v180 = vld [vmem:[#allocation7 + $0x4] sm:$0xf]
    %v181 = vld [vmem:[#allocation7 + $0x8] sm:$0xf]
    %v182 = vld [vmem:[#allocation7 + $0xc] sm:$0xf]
    %v183 = vld [vmem:[#allocation7 + $0x10] sm:$0xf]
    %v184 = vld [vmem:[#allocation7 + $0x14] sm:$0xf]
    %v185 = vld [vmem:[#allocation7 + $0x18] sm:$0xf]
    %v186 = vld [vmem:[#allocation7 + $0x1c] sm:$0xf]
    %v187 = vld [vmem:[#allocation7 + $0x20] sm:$0xf]
    %v188 = vld [vmem:[#allocation7 + $0x24] sm:$0xf]
    %v189 = vld [vmem:[#allocation7 + $0x28] sm:$0xf]
    %v190 = vld [vmem:[#allocation7 + $0x2c] sm:$0xf]
    %v191 = vld [vmem:[#allocation7 + $0x30] sm:$0xf]
    %v192 = vld [vmem:[#allocation7 + $0x34] sm:$0xf]
    %v193 = vld [vmem:[#allocation7 + $0x38] sm:$0xf]
    %v194 = vld [vmem:[#allocation7 + $0x3c] sm:$0xf]
    %v195 = vperm.slane %v96, 0
    %v212 = vunpack.c.l.b16 %v179
    %v213 = vunpack.c.l.b16 %v180
    %v214 = vunpack.c.l.b16 %v181
    %v215 = vunpack.c.l.b16 %v182
    %v216 = vunpack.c.l.b16 %v183
    %v217 = vunpack.c.l.b16 %v184
    %v218 = vunpack.c.l.b16 %v185
    %v219 = vunpack.c.l.b16 %v186
    %v220 = vunpack.c.l.b16 %v187
    %v221 = vunpack.c.l.b16 %v188
    %v222 = vunpack.c.l.b16 %v189
    %v223 = vunpack.c.l.b16 %v190
    %v224 = vunpack.c.l.b16 %v191
    %v225 = vunpack.c.l.b16 %v192
    %v226 = vunpack.c.l.b16 %v193
    %v227 = vunpack.c.l.b16 %v194
    %v228 = vpack.c.b16 %v213, %v212
    %v229 = vpack.c.b16 %v215, %v214
    %v230 = vpack.c.b16 %v217, %v216
    %v231 = vpack.c.b16 %v219, %v218
    %v232 = vpack.c.b16 %v221, %v220
    %v233 = vpack.c.b16 %v223, %v222
    %v234 = vpack.c.b16 %v225, %v224
    %v235 = vpack.c.b16 %v227, %v226
    %244 = vmatpush.bf16.msra.mxu0 %v235
    %245 = vmatpush.bf16.msra.mxu0 %v234
    %246 = vmatpush.bf16.msra.mxu0 %v233
    %247 = vmatpush.bf16.msra.mxu0 %v232
    %248 = vmatpush.bf16.msra.mxu0 %v231
    %249 = vmatpush.bf16.msra.mxu0 %v230
    %250 = vmatpush.bf16.msra.mxu0 %v229
    %251 = vmatpush.bf16.msra.mxu0 %v228
    %252 = vmatmul.bf16.gmra.mxu0 %v178
    %v253 = vpop.f32.mrf.mxu0
    %v254 = vadd.f32 %v195, %v253
    %v255 = vpop.f32.mrf.mxu0
    %256 = vdwg.mxu0
    %v257 = vmax.f32 %v254, 0.0
    %v258 = vpack.c.bf16 %v257, %v257
    %v259 = vld [vmem:[#allocation8] sm:$0xf]
    %v260 = vld [vmem:[#allocation8 + $0x4] sm:$0xf]
    %v261 = vld [vmem:[#allocation8 + $0x8] sm:$0xf]
    %v262 = vld [vmem:[#allocation8 + $0xc] sm:$0xf]
    %v263 = vld [vmem:[#allocation8 + $0x10] sm:$0xf]
    %v264 = vld [vmem:[#allocation8 + $0x14] sm:$0xf]
    %v265 = vld [vmem:[#allocation8 + $0x18] sm:$0xf]
    %v266 = vld [vmem:[#allocation8 + $0x1c] sm:$0xf]
    %v267 = vld [vmem:[#allocation8 + $0x20] sm:$0xf]
    %v268 = vld [vmem:[#allocation8 + $0x24] sm:$0xf]
    %v269 = vld [vmem:[#allocation8 + $0x28] sm:$0xf]
    %v270 = vld [vmem:[#allocation8 + $0x2c] sm:$0xf]
    %v271 = vld [vmem:[#allocation8 + $0x30] sm:$0xf]
    %v272 = vld [vmem:[#allocation8 + $0x34] sm:$0xf]
    %v273 = vld [vmem:[#allocation8 + $0x38] sm:$0xf]
    %v274 = vld [vmem:[#allocation8 + $0x3c] sm:$0xf]
    %v275 = vperm.slane %v97, 0
    %v292 = vunpack.c.l.b16 %v259
    %v293 = vunpack.c.l.b16 %v260
    %v294 = vunpack.c.l.b16 %v261
    %v295 = vunpack.c.l.b16 %v262
    %v296 = vunpack.c.l.b16 %v263
    %v297 = vunpack.c.l.b16 %v264
    %v298 = vunpack.c.l.b16 %v265
    %v299 = vunpack.c.l.b16 %v266
    %v300 = vunpack.c.l.b16 %v267
    %v301 = vunpack.c.l.b16 %v268
    %v302 = vunpack.c.l.b16 %v269
    %v303 = vunpack.c.l.b16 %v270
    %v304 = vunpack.c.l.b16 %v271
    %v305 = vunpack.c.l.b16 %v272
    %v306 = vunpack.c.l.b16 %v273
    %v307 = vunpack.c.l.b16 %v274
    %v308 = vpack.c.b16 %v293, %v292
    %v309 = vpack.c.b16 %v295, %v294
    %v310 = vpack.c.b16 %v297, %v296
    %v311 = vpack.c.b16 %v299, %v298
    %v312 = vpack.c.b16 %v301, %v300
    %v313 = vpack.c.b16 %v303, %v302
    %v314 = vpack.c.b16 %v305, %v304
    %v315 = vpack.c.b16 %v307, %v306
    %324 = vmatpush.bf16.msra.mxu0 %v315
    %325 = vmatpush.bf16.msra.mxu0 %v314
    %326 = vmatpush.bf16.msra.mxu0 %v313
    %327 = vmatpush.bf16.msra.mxu0 %v312
    %328 = vmatpush.bf16.msra.mxu0 %v311
    %329 = vmatpush.bf16.msra.mxu0 %v310
    %330 = vmatpush.bf16.msra.mxu0 %v309
    %331 = vmatpush.bf16.msra.mxu0 %v308
    %332 = vmatmul.bf16.gmra.mxu0 %v258
    %v333 = vpop.f32.mrf.mxu0
    %v334 = vadd.f32 %v275, %v333
    %v335 = vpop.f32.mrf.mxu0
    %336 = vdwg.mxu0
    %337 = vst [vmem:[#allocation11] sm:$0xff] %v334
    // Predicated region
    $region42: #{tpu_custom_call.1} parent=1 // pred_check
      _
    $region43: #{tpu_custom_call.1} parent=1 // pred_check_branch
      %339 = sbr.rel (0) target = $region45
    $region44: #{tpu_custom_call.1} parent=1 // pred_region
      %341 = vsyncadd [#allocation4], 0
      %s343 = sshll.u32 [#allocation11], 4
      %s344 = int_to_ptr.vmem [resolvable:$true] %s343
      %s345 = sshll.u32 %s5, 4
      %s346 = int_to_ptr.hbm [resolvable:$true] %s345
      %348 = dma.vmem_to_hbm [thread:$0]  %s344, 128, %s346, [#allocation4]
    $region45: #{tpu_custom_call.1} parent=1 // pred_fallthru
      _
    // Predicated region
    $region46: #{tpu_custom_call.1} parent=1 // pred_check
      _
    $region47: #{tpu_custom_call.1} parent=1 // pred_check_branch
      %350 = sbr.rel (0) target = $region49
    $region48: #{tpu_custom_call.1} parent=1 // pred_region
      %352 = dma.done [#allocation4], 128
    $region49: #{tpu_custom_call.1} parent=1 // pred_fallthru
      _
    %353 = vsyncpa [#allocation3], 1
    %354 = vsyncpa [#allocation6], 1
    %355 = vsyncpa [#allocation9], 1
    %356 = vsyncpa [#allocation4], 1

</llo_original>
